<compile_context>
chip_gen: v5e
topology: v5e:2x2
jax: 0.10.0
libtpu: 0.0.40
codegen_flags: <defaults>
</compile_context>

<pallas_src>
import jax
import jax.numpy as jnp
from jax.experimental import pallas as pl
from jax.experimental.pallas import tpu as pltpu

SIZE = 100   # matches the PyTorch module
PAD = 128    # lane-aligned hidden width


def mlp_kernel(x_ref, w1_ref, b1_ref, w2_ref, b2_ref, o_ref):
    mxu_dtype = w1_ref.dtype                               # f32 or bf16
    x = x_ref[...].astype(mxu_dtype)                       # [tile, 100]
    # Linear 1 (MXU, f32 accumulate; Mosaic masks the K=100 contraction).
    h = jnp.dot(x, w1_ref[...], preferred_element_type=jnp.float32)   # [tile, 128]
    # Bias + ReLU in f32 on the VPU (free under the MXU; v5e has no bf16 VALU).
    h = jnp.maximum(h + b1_ref[...], 0.0)
    # Linear 2 (MXU, aligned K=128, f32 accumulate) + bias; native 100-wide store.
    y = jnp.dot(h.astype(mxu_dtype), w2_ref[...],
                preferred_element_type=jnp.float32)        # [tile, 100]
    o_ref[...] = (y + b2_ref[...]).astype(o_ref.dtype)


def prepare_params(w1, b1, w2, b2, compute_dtype=jnp.bfloat16):
    """One-time prep (NOT on the per-call path).

    PyTorch Linear stores weight as [out, in]; we transpose to [in, out] and
    zero-pad the hidden dimension to 128 so it lives lane-dense in VMEM.
    """
    w1p = jnp.zeros((SIZE, PAD), jnp.float32).at[:, :SIZE].set(w1.T)   # [100, 128]
    b1p = jnp.zeros((1, PAD), jnp.float32).at[0, :SIZE].set(b1)        # [1, 128]
    w2p = jnp.zeros((PAD, SIZE), jnp.float32).at[:SIZE, :].set(w2.T)   # [128, 100]
    b2p = jnp.asarray(b2, jnp.float32).reshape(1, SIZE)                # [1, 100]
    return w1p.astype(compute_dtype), b1p, w2p.astype(compute_dtype), b2p


def _round_up(n, m):
    return ((n + m - 1) // m) * m


def mlp_forward(x, params, *, tile_m=2048):
    """x: [B, SIZE]. params: output of prepare_params. Returns [B, SIZE] in x.dtype."""
    w1p, b1p, w2p, b2p = params
    B = x.shape[0]

    # Batch tile: multiple of 8 sublanes; keep >=2 grid steps when B >= 16 so
    # both v7x TensorCores get work; tiny batches collapse to one full-dim tile.
    tile = min(_round_up(tile_m, 8), _round_up(pl.cdiv(B, 2), 8))
    if tile >= B or B < 16:
        tile = B                      # single block == full array dim (legal)
    grid = (pl.cdiv(B, tile),)        # last block may be partial -> masked DMA

    return pl.pallas_call(
        mlp_kernel,
        out_shape=jax.ShapeDtypeStruct((B, SIZE), x.dtype),
        grid=grid,
        in_specs=[
            pl.BlockSpec((tile, SIZE), lambda i: (i, 0)),   # activations: tiled over batch
            pl.BlockSpec((SIZE, PAD), lambda i: (0, 0)),    # w1: resident across grid
            pl.BlockSpec((1, PAD),    lambda i: (0, 0)),    # b1: resident
            pl.BlockSpec((PAD, SIZE), lambda i: (0, 0)),    # w2: resident
            pl.BlockSpec((1, SIZE),   lambda i: (0, 0)),    # b2: resident
        ],
        out_specs=pl.BlockSpec((tile, SIZE), lambda i: (i, 0)),
        compiler_params=pltpu.CompilerParams(
            dimension_semantics=("parallel",),              # megacore-shard batch on v7x
            vmem_limit_bytes=32 * 1024 * 1024,              # v5e default is only 16 MiB
        ),
    )(x, w1p, b1p, w2p, b2p)


def init_params(key):
    # Deterministic init mimicking nn.Linear's default U(-1/sqrt(in), 1/sqrt(in)).
    k1, k2, k3, k4 = jax.random.split(key, 4)
    bound = 1.0 / jnp.sqrt(jnp.float32(SIZE))
    w1 = jax.random.uniform(k1, (SIZE, SIZE), jnp.float32, -bound, bound)
    b1 = jax.random.uniform(k2, (SIZE,), jnp.float32, -bound, bound)
    w2 = jax.random.uniform(k3, (SIZE, SIZE), jnp.float32, -bound, bound)
    b2 = jax.random.uniform(k4, (SIZE,), jnp.float32, -bound, bound)
    return w1, b1, w2, b2


def _ref(x, w1, b1, w2, b2):
    return jnp.maximum(x @ w1.T + b1, 0.0) @ w2.T + b2


if __name__ == "__main__":
    key = jax.random.PRNGKey(0)
    kx, kp, kbig, krag = jax.random.split(key, 4)
    w1, b1, w2, b2 = init_params(kp)

    # --- small batch, exact f32 path: tight check against the PyTorch semantics ---
    batch = 8
    x = jax.random.normal(kx, (batch, SIZE), jnp.float32)
    params_f32 = prepare_params(w1, b1, w2, b2, compute_dtype=jnp.float32)
    out_f32 = mlp_forward(x, params_f32)
    jax.block_until_ready(out_f32)
    ref_small = _ref(x, w1, b1, w2, b2)
    assert out_f32.shape == (batch, SIZE)
    assert jnp.allclose(out_f32, ref_small, atol=1e-4, rtol=1e-4)

    # --- bf16-MXU weights (f32 accumulate / bias / ReLU): looser tolerance ---
    params_bf16 = prepare_params(w1, b1, w2, b2, compute_dtype=jnp.bfloat16)
    out_bf16 = mlp_forward(x, params_bf16)
    jax.block_until_ready(out_bf16)
    assert jnp.allclose(out_bf16, ref_small, atol=5e-2, rtol=5e-2)

    # --- larger batch: exercises the grid (2 tiles, resident weights, megacore split) ---
    xb = jax.random.normal(kbig, (512, SIZE), jnp.float32)
    out_big = mlp_forward(xb, params_bf16)
    jax.block_until_ready(out_big)
    ref_big = _ref(xb, w1, b1, w2, b2)
    assert out_big.shape == (512, SIZE)
    assert jnp.allclose(out_big, ref_big, atol=5e-2, rtol=5e-2)

    # --- ragged batch: non-divisible last tile handled by masked block DMAs ---
    xr = jax.random.normal(krag, (500, SIZE), jnp.float32)
    out_rag = mlp_forward(xr, params_f32)
    jax.block_until_ready(out_rag)
    ref_rag = _ref(xr, w1, b1, w2, b2)
    assert out_rag.shape == (500, SIZE)
    assert jnp.allclose(out_rag, ref_rag, atol=1e-4, rtol=1e-4)

    print("KERNEL_OK")
</pallas_src>

<mosaic_0001>
module attributes {stable_mosaic.version = 11 : i64} {
  func.func @mlp_kernel(%arg0: i32, %arg1: memref<8x100xf32, #tpu.memory_space<vmem>>, %arg2: memref<100x128xf32, #tpu.memory_space<vmem>>, %arg3: memref<1x128xf32, #tpu.memory_space<vmem>>, %arg4: memref<128x100xf32, #tpu.memory_space<vmem>>, %arg5: memref<1x100xf32, #tpu.memory_space<vmem>>, %arg6: memref<8x100xf32, #tpu.memory_space<vmem>>) attributes {dimension_semantics = [#tpu.dimension_semantics<parallel>], iteration_bounds = array<i64: 1>, scalar_prefetch = 0 : i64, scratch_operands = 0 : i64, tpu.core_type = #tpu.core_type<tc>, window_params = [{transform_indices = @transform_0, window_bounds = array<i64: 8, 100>}, {pipeline_mode = #tpu.pipeline_mode<synchronous>, transform_indices = @transform_1, window_bounds = array<i64: 100, 128>}, {pipeline_mode = #tpu.pipeline_mode<synchronous>, transform_indices = @transform_2, window_bounds = array<i64: 1, 128>}, {pipeline_mode = #tpu.pipeline_mode<synchronous>, transform_indices = @transform_3, window_bounds = array<i64: 128, 100>}, {pipeline_mode = #tpu.pipeline_mode<synchronous>, transform_indices = @transform_4, window_bounds = array<i64: 1, 100>}, {transform_indices = @transform_5, window_bounds = array<i64: 8, 100>}]} {
    %c0 = arith.constant 0 : index
    %c0_0 = arith.constant 0 : index
    %0 = vector.load %arg1[%c0, %c0_0] : memref<8x100xf32, #tpu.memory_space<vmem>>, vector<8x100xf32>
    %c0_1 = arith.constant 0 : index
    %c0_2 = arith.constant 0 : index
    %1 = vector.load %arg2[%c0_1, %c0_2] : memref<100x128xf32, #tpu.memory_space<vmem>>, vector<100x128xf32>
    %cst = arith.constant dense<0.000000e+00> : vector<8x128xf32>
    %2 = tpu.matmul %0, %1, %cst {dimension_numbers = #tpu.dot_dimension_numbers<[1], [0], [0], [1], [0, 0, 1, 1], [], []>} : vector<8x100xf32>, vector<100x128xf32>, vector<8x128xf32> -> vector<8x128xf32>
    %c0_3 = arith.constant 0 : index
    %c0_4 = arith.constant 0 : index
    %3 = vector.load %arg3[%c0_3, %c0_4] : memref<1x128xf32, #tpu.memory_space<vmem>>, vector<1x128xf32>
    %4 = vector.broadcast %3 : vector<1x128xf32> to vector<8x128xf32>
    %5 = arith.addf %2, %4 : vector<8x128xf32>
    %cst_5 = arith.constant 0.000000e+00 : f32
    %6 = vector.broadcast %cst_5 : f32 to vector<8x128xf32>
    %7 = arith.maximumf %5, %6 : vector<8x128xf32>
    %c0_6 = arith.constant 0 : index
    %c0_7 = arith.constant 0 : index
    %8 = vector.load %arg4[%c0_6, %c0_7] : memref<128x100xf32, #tpu.memory_space<vmem>>, vector<128x100xf32>
    %cst_8 = arith.constant dense<0.000000e+00> : vector<8x100xf32>
    %9 = tpu.matmul %7, %8, %cst_8 {dimension_numbers = #tpu.dot_dimension_numbers<[1], [0], [0], [1], [0, 0, 1, 1], [], []>} : vector<8x128xf32>, vector<128x100xf32>, vector<8x100xf32> -> vector<8x100xf32>
    %c0_9 = arith.constant 0 : index
    %c0_10 = arith.constant 0 : index
    %10 = vector.load %arg5[%c0_9, %c0_10] : memref<1x100xf32, #tpu.memory_space<vmem>>, vector<1x100xf32>
    %11 = vector.broadcast %10 : vector<1x100xf32> to vector<8x100xf32>
    %12 = arith.addf %9, %11 : vector<8x100xf32>
    %c0_11 = arith.constant 0 : index
    %c0_12 = arith.constant 0 : index
    %13 = vector.load %arg6[%c0_11, %c0_12] : memref<8x100xf32, #tpu.memory_space<vmem>>, vector<8x100xf32>
    tpu.vector_store %arg6[%c0_11, %c0_12], %12 {strides = array<i32>} : memref<8x100xf32, #tpu.memory_space<vmem>>, vector<8x100xf32>,
    return
  }
  func.func @transform_0(%arg0: i32) -> (i32, i32) {
    %c0_i32 = arith.constant 0 : i32
    %c0_i32_0 = arith.constant 0 : i32
    return %arg0, %c0_i32 : i32, i32
  }
  func.func @transform_1(%arg0: i32) -> (i32, i32) {
    %c0_i32 = arith.constant 0 : i32
    %c0_i32_0 = arith.constant 0 : i32
    %c0_i32_1 = arith.constant 0 : i32
    return %c0_i32, %c0_i32_0 : i32, i32
  }
  func.func @transform_2(%arg0: i32) -> (i32, i32) {
    %c0_i32 = arith.constant 0 : i32
    %c0_i32_0 = arith.constant 0 : i32
    %c0_i32_1 = arith.constant 0 : i32
    return %c0_i32, %c0_i32_0 : i32, i32
  }
  func.func @transform_3(%arg0: i32) -> (i32, i32) {
    %c0_i32 = arith.constant 0 : i32
    %c0_i32_0 = arith.constant 0 : i32
    %c0_i32_1 = arith.constant 0 : i32
    return %c0_i32, %c0_i32_0 : i32, i32
  }
  func.func @transform_4(%arg0: i32) -> (i32, i32) {
    %c0_i32 = arith.constant 0 : i32
    %c0_i32_0 = arith.constant 0 : i32
    %c0_i32_1 = arith.constant 0 : i32
    return %c0_i32, %c0_i32_0 : i32, i32
  }
  func.func @transform_5(%arg0: i32) -> (i32, i32) {
    %c0_i32 = arith.constant 0 : i32
    %c0_i32_0 = arith.constant 0 : i32
    return %arg0, %c0_i32 : i32, i32
  }
}

</mosaic_0001>

<llo_original>
// kernel: tpu_custom_call.1
$region0: #{tpu_custom_call.1}
  #allocation0 [shape = 'u32[]', space=smem, size = 0x4, offset = 0x4, fixed_abs, tag = 'smem constant byte address 0x4 - core index']
  #allocation1 [shape = 'u32[72,128]{1,0:T(1,128)}', space=vmem, size = 0x9000, scoped, tag = 'internal scratch']
  %s0 = inlined_call_operand.vmem [shape: f32[8,100], index: 0, kind: input, shape index: {}]
  %s1 = inlined_call_operand.vmem [shape: f32[100,128], index: 1, kind: input, shape index: {}]
  %s2 = inlined_call_operand.vmem [shape: f32[1,128], index: 2, kind: input, shape index: {}]
  %s3 = inlined_call_operand.vmem [shape: f32[128,100], index: 3, kind: input, shape index: {}]
  %s4 = inlined_call_operand.vmem [shape: f32[1,100], index: 4, kind: input, shape index: {}]
  %s5 = inlined_call_operand.hbm [shape: f32[8,100], index: 5, kind: output, shape index: {}]
  %s6 = sld [smem:[#allocation0]]
  $region30: #{tpu_custom_call.1} parent=0
    _
  %s8 = ssub.s32 1, %s6
  %s9 = scalar_select 0, %s8, %s6
  $region1: #{tpu_custom_call.1} parent=0
    #allocation2 [shape = 'u8[4096]{0}', space=vmem, size = 0x1000, scoped, tag = 'output window, operand 0, single buffered']
    #allocation3 [shape = 's32[1]{0}', space=sflag, size = 0x4, scoped, tag = 'scoped memory for tpu_custom_call.1']
    %10 = vsyncpa [#allocation3], 0
    // Predicated region
    $region2: #{tpu_custom_call.1} parent=1 // pred_check
      _
    $region3: #{tpu_custom_call.1} parent=1 // pred_check_branch
      %12 = sbr.rel (0) target = $region5
    $region4: #{tpu_custom_call.1} parent=1 // pred_region
      _
    $region5: #{tpu_custom_call.1} parent=1 // pred_fallthru
      _
    // Predicated region
    $region6: #{tpu_custom_call.1} parent=1 // pred_check
      _
    $region7: #{tpu_custom_call.1} parent=1 // pred_check_branch
      %14 = sbr.rel (0) target = $region9
    $region8: #{tpu_custom_call.1} parent=1 // pred_region
      _
    $region9: #{tpu_custom_call.1} parent=1 // pred_fallthru
      _
    // Predicated region
    $region10: #{tpu_custom_call.1} parent=1 // pred_check
      _
    $region11: #{tpu_custom_call.1} parent=1 // pred_check_branch
      %16 = sbr.rel (0) target = $region13
    $region12: #{tpu_custom_call.1} parent=1 // pred_region
      _
    $region13: #{tpu_custom_call.1} parent=1 // pred_fallthru
      _
    // Predicated region
    $region14: #{tpu_custom_call.1} parent=1 // pred_check
      _
    $region15: #{tpu_custom_call.1} parent=1 // pred_check_branch
      %18 = sbr.rel (0) target = $region17
    $region16: #{tpu_custom_call.1} parent=1 // pred_region
      _
    $region17: #{tpu_custom_call.1} parent=1 // pred_fallthru
      _
    // Predicated region
    $region18: #{tpu_custom_call.1} parent=1 // pred_check
      _
    $region19: #{tpu_custom_call.1} parent=1 // pred_check_branch
      %20 = sbr.rel (0) target = $region21
    $region20: #{tpu_custom_call.1} parent=1 // pred_region
      _
    $region21: #{tpu_custom_call.1} parent=1 // pred_fallthru
      _
    %v21 = vld [vmem:[%s0] sm:$0xff]
    %v22 = vld [vmem:[%s1] sm:$0xff]
    %v23 = vld [vmem:[%s1 + $0x8] sm:$0xff]
    %v24 = vld [vmem:[%s1 + $0x10] sm:$0xff]
    %v25 = vld [vmem:[%s1 + $0x18] sm:$0xff]
    %v26 = vld [vmem:[%s1 + $0x20] sm:$0xff]
    %v27 = vld [vmem:[%s1 + $0x28] sm:$0xff]
    %v28 = vld [vmem:[%s1 + $0x30] sm:$0xff]
    %v29 = vld [vmem:[%s1 + $0x38] sm:$0xff]
    %v30 = vld [vmem:[%s1 + $0x40] sm:$0xff]
    %v31 = vld [vmem:[%s1 + $0x48] sm:$0xff]
    %v32 = vld [vmem:[%s1 + $0x50] sm:$0xff]
    %v33 = vld [vmem:[%s1 + $0x58] sm:$0xff]
    %v34 = vld [vmem:[%s1 + $0x60] sm:$0xf]
    %v35 = vld [vmem:[%s2] sm:$0x1]
    %v37 = vperm.slane %v35, 0
    %vm39 = vcmask 818176
    %v41 = vsel %vm39, %v21, 0
    %vm43 = vcmask 1043456
    %v45 = vsel %vm43, %v34, 0
    %47 = vmatpush.msra.mxu0 0.0
    %48 = vmatpush.msra.mxu0 0.0
    %49 = vmatpush.msra.mxu0 0.0
    %50 = vmatpush.msra.mxu0 %v45
    %51 = vmatpush.msra.mxu0 %v33
    %52 = vmatpush.msra.mxu0 %v32
    %53 = vmatpush.msra.mxu0 %v31
    %54 = vmatpush.msra.mxu0 %v30
    %55 = vmatpush.msra.mxu0 %v29
    %56 = vmatpush.msra.mxu0 %v28
    %57 = vmatpush.msra.mxu0 %v27
    %58 = vmatpush.msra.mxu0 %v26
    %59 = vmatpush.msra.mxu0 %v25
    %60 = vmatpush.msra.mxu0 %v24
    %61 = vmatpush.msra.mxu0 %v23
    %62 = vmatpush.msra.mxu0 %v22
    %63 = vmatmul.f32.gmra.mxu0 %v41
    %v64 = vpop.f32.mrf.mxu0
    %v65 = vadd.f32 %v37, %v64
    %66 = vdwg.mxu0
    %v67 = vmax.f32 %v65, 0.0
    %v68 = vld [vmem:[%s3] sm:$0xff]
    %v69 = vld [vmem:[%s3 + $0x8] sm:$0xff]
    %v70 = vld [vmem:[%s3 + $0x10] sm:$0xff]
    %v71 = vld [vmem:[%s3 + $0x18] sm:$0xff]
    %v72 = vld [vmem:[%s3 + $0x20] sm:$0xff]
    %v73 = vld [vmem:[%s3 + $0x28] sm:$0xff]
    %v74 = vld [vmem:[%s3 + $0x30] sm:$0xff]
    %v75 = vld [vmem:[%s3 + $0x38] sm:$0xff]
    %v76 = vld [vmem:[%s3 + $0x40] sm:$0xff]
    %v77 = vld [vmem:[%s3 + $0x48] sm:$0xff]
    %v78 = vld [vmem:[%s3 + $0x50] sm:$0xff]
    %v79 = vld [vmem:[%s3 + $0x58] sm:$0xff]
    %v80 = vld [vmem:[%s3 + $0x60] sm:$0xff]
    %v81 = vld [vmem:[%s3 + $0x68] sm:$0xff]
    %v82 = vld [vmem:[%s3 + $0x70] sm:$0xff]
    %v83 = vld [vmem:[%s3 + $0x78] sm:$0xff]
    %v84 = vld [vmem:[%s4] sm:$0x1]
    %v86 = vperm.slane %v84, 0
    %88 = vmatpush.msra.mxu0 %v83
    %89 = vmatpush.msra.mxu0 %v82
    %90 = vmatpush.msra.mxu0 %v81
    %91 = vmatpush.msra.mxu0 %v80
    %92 = vmatpush.msra.mxu0 %v79
    %93 = vmatpush.msra.mxu0 %v78
    %94 = vmatpush.msra.mxu0 %v77
    %95 = vmatpush.msra.mxu0 %v76
    %96 = vmatpush.msra.mxu0 %v75
    %97 = vmatpush.msra.mxu0 %v74
    %98 = vmatpush.msra.mxu0 %v73
    %99 = vmatpush.msra.mxu0 %v72
    %100 = vmatpush.msra.mxu0 %v71
    %101 = vmatpush.msra.mxu0 %v70
    %102 = vmatpush.msra.mxu0 %v69
    %103 = vmatpush.msra.mxu0 %v68
    %104 = vmatmul.f32.gmra.mxu0 %v67
    %v105 = vpop.f32.mrf.mxu0
    %v106 = vadd.f32 %v86, %v105
    %107 = vdwg.mxu0
    %108 = vst.msk [vmem:[#allocation2] sm:$0xff] %vm39, %v106
    // Predicated region
    $region22: #{tpu_custom_call.1} parent=1 // pred_check
      _
    $region23: #{tpu_custom_call.1} parent=1 // pred_check_branch
      %110 = sbr.rel (0) target = $region25
    $region24: #{tpu_custom_call.1} parent=1 // pred_region
      %112 = vsyncadd [#allocation3], 0
      %s114 = sshll.u32 [#allocation2], 4
      %s115 = int_to_ptr.vmem [resolvable:$true] %s114
      %s116 = sshll.u32 %s5, 4
      %s117 = int_to_ptr.hbm [resolvable:$true] %s116
      %119 = dma.vmem_to_hbm [thread:$0]  %s115, 128, %s117, [#allocation3]
    $region25: #{tpu_custom_call.1} parent=1 // pred_fallthru
      _
    // Predicated region
    $region26: #{tpu_custom_call.1} parent=1 // pred_check
      _
    $region27: #{tpu_custom_call.1} parent=1 // pred_check_branch
      %121 = sbr.rel (0) target = $region29
    $region28: #{tpu_custom_call.1} parent=1 // pred_region
      %123 = dma.done [#allocation3], 128
    $region29: #{tpu_custom_call.1} parent=1 // pred_fallthru
      _
    %124 = vsyncpa [#allocation3], 1

</llo_original>
